<compile_context>
chip_gen: v5e
topology: v5e:2x2
jax: 0.10.0
libtpu: 0.0.40
codegen_flags: <defaults>
</compile_context>

<pallas_src>
import functools

import jax
import jax.numpy as jnp
from jax.experimental import pallas as pl
from jax.experimental.pallas import tpu as pltpu


def _object_mlp_kernel(x_ref, w1_ref, b1_ref, w2_ref, b2_ref, ot_ref):
    """Fused 2-layer MLP on one object tile; objects sit on the lane axis.

    x_ref : [tile_n, input_size]   (natural HBM layout of x)
    w1_ref: [hidden, input_size]   b1_ref: [hidden, 1]
    w2_ref: [output, hidden]       b2_ref: [output, 1]
    ot_ref: [output, tile_n]       (objects-last / lane-dense output)
    """
    x = x_ref[...]
    w1 = w1_ref[...]

    # Layer 1:  h_T = W1 @ x^T  -> [hidden, tile_n].
    # Contracting the LAST dims of both operands does the [tile_n, in] ->
    # [in, tile_n] flip inside the matmul itself (no wrapper transpose, no
    # materialised transposed copy of x).
    # NOTE: if bundle profiling ever shows the MXU push/pop path binding for
    # this K=input_size matmul, it can be replaced with input_size VPU
    # broadcast-FMAs; with K=4 the MXU work is idle filler, so keep it simple.
    h = jnp.einsum("hi,ni->hn", w1, x, preferred_element_type=jnp.float32)
    h = jnp.maximum(h + b1_ref[...].astype(jnp.float32), 0.0)

    # Layer 2: Linear only (no ReLU on the final layer, matching nn.Sequential).
    # Cast the activation back to the weight dtype so bf16 weights keep the
    # native bf16 MXU path (identity for f32).
    o = jnp.dot(w2_ref[...], h.astype(w2_ref.dtype),
                preferred_element_type=jnp.float32)
    o = o + b2_ref[...].astype(jnp.float32)

    ot_ref[...] = o.astype(ot_ref.dtype)


def _pick_tile_n(n_obj, tile_n):
    """Choose the object-axis (lane) tile.

    Heuristics from the perf review:
      * big tiles (512-2048): per-grid-step overhead dominates at tile_n=128.
      * multiples of 256 (v6e/v7x 256-wide MXU; also 128-multiples for v5e).
      * keep the grid >= 2 steps when possible so ("parallel",) semantics can
        shard the object axis across v7x's two TensorCores.
      * lane-dim blocks must be a multiple of 128 or span the full axis.
    """
    if tile_n is None:
        if n_obj <= 256:
            return n_obj                               # single full block
        half = pl.cdiv(n_obj, 2)                       # keep grid >= 2 steps
        tile_n = min(2048, pl.cdiv(half, 256) * 256)
    if tile_n >= n_obj:
        return n_obj
    return max(128, (tile_n // 128) * 128)             # keep lane blocks 128-aligned


@functools.partial(jax.jit, static_argnames=("tile_n",))
def object_model_forward_t(x, params, *, tile_n=None):
    """ObjectModel forward, objects-last (preferred / fast-path) layout.

    Args:
      x: [n_objects, input_size]
      params: dict with w1:[hidden,input], b1:[hidden,1], w2:[output,hidden],
        b2:[output,1]  (native nn.Linear [out,in] layout, biases as columns).
      tile_n: optional override of the object-axis tile (auto-picked if None).
    Returns:
      [output_size, n_objects] -- lane-dense layout; the InteractionNetwork
      aggregation step should consume this directly (no extra HBM pass).
    """
    n_obj, in_size = x.shape
    hid = params["w1"].shape[0]
    out_size = params["w2"].shape[0]

    tn = _pick_tile_n(n_obj, tile_n)
    grid = (pl.cdiv(n_obj, tn),)

    def resident(shape):
        # Full-array block with a constant index_map -> fetched once, stays
        # resident in VMEM across all grid steps.
        return pl.BlockSpec(shape, lambda i: (0,) * len(shape))

    grid_spec = pltpu.PrefetchScalarGridSpec(
        num_scalar_prefetch=0,
        grid=grid,
        in_specs=[
            pl.BlockSpec((tn, in_size), lambda i: (i, 0)),       # x tile (natural layout)
            resident((hid, in_size)), resident((hid, 1)),        # layer 1
            resident((out_size, hid)), resident((out_size, 1)),  # layer 2
        ],
        out_specs=pl.BlockSpec((out_size, tn), lambda i: (0, i)),
    )

    return pl.pallas_call(
        _object_mlp_kernel,
        out_shape=jax.ShapeDtypeStruct((out_size, n_obj), x.dtype),
        grid_spec=grid_spec,
        compiler_params=pltpu.CompilerParams(
            dimension_semantics=("parallel",),
        ),
    )(x, params["w1"], params["b1"], params["w2"], params["b2"])


@functools.partial(jax.jit, static_argnames=("tile_n",))
def object_model_forward(x, params, *, tile_n=None):
    """Spec-compatible forward: [n_objects, input_size] -> [n_objects, output_size].

    The transpose below is a thin compatibility shim only; real pipelines
    should consume object_model_forward_t's [output_size, n_objects] output
    directly to avoid the extra HBM pass over the (dominant) output bytes.
    """
    return object_model_forward_t(x, params, tile_n=tile_n).T


def init_object_model_params(key, input_size, hidden_size, output_size):
    """Deterministic init matching nn.Linear default (uniform +-1/sqrt(fan_in)).

    Weights kept in native PyTorch [out, in] layout; biases as [out, 1] columns
    so the kernel broadcast-adds along lanes directly.
    """
    keys = jax.random.split(key, 4)
    dims = [(input_size, hidden_size), (hidden_size, output_size)]
    params = {}
    for idx, (din, dout) in enumerate(dims, start=1):
        bound = 1.0 / jnp.sqrt(jnp.float32(din))
        w = jax.random.uniform(keys[2 * (idx - 1)], (dout, din),
                               jnp.float32, -bound, bound)
        b = jax.random.uniform(keys[2 * (idx - 1) + 1], (dout, 1),
                               jnp.float32, -bound, bound)
        params[f"w{idx}"] = w
        params[f"b{idx}"] = b
    return params


def object_model_ref(x, params):
    """Pure-JAX reference matching the PyTorch module exactly."""
    h = jnp.maximum(x @ params["w1"].T + params["b1"][:, 0], 0.0)
    return h @ params["w2"].T + params["b2"][:, 0]


if __name__ == "__main__":
    # InteractionNetwork-like sizes; n_objects deliberately NOT a multiple of
    # the tile so the ragged-tail (partial last block) path is exercised, and
    # large enough that the auto-picked tile (256) gives a 2-step grid.
    n_objects, input_size, hidden_size, output_size = 300, 4, 32, 16

    key = jax.random.PRNGKey(0)
    k_x, k_p = jax.random.split(key)
    x = jax.random.normal(k_x, (n_objects, input_size), jnp.float32)
    params = init_object_model_params(k_p, input_size, hidden_size, output_size)

    ref = object_model_ref(x, params)

    # Fast path: objects-last layout (what the downstream aggregation consumes).
    out_t = jax.block_until_ready(object_model_forward_t(x, params))
    assert out_t.shape == (output_size, n_objects)
    assert jnp.allclose(out_t.T, ref, atol=1e-5, rtol=1e-5), "mismatch (objects-last)"

    # Spec-compatible layout.
    out = jax.block_until_ready(object_model_forward(x, params))
    assert out.shape == (n_objects, output_size)
    assert jnp.allclose(out, ref, atol=1e-5, rtol=1e-5), "mismatch (spec layout)"

    # Tiny-shape path: tile_n == n_objects (single full block, grid of 1).
    x_small = jax.random.normal(jax.random.PRNGKey(1), (40, input_size), jnp.float32)
    out_small = jax.block_until_ready(object_model_forward(x_small, params))
    assert out_small.shape == (40, output_size)
    assert jnp.allclose(out_small, object_model_ref(x_small, params),
                        atol=1e-5, rtol=1e-5), "mismatch (small shape)"

    print("KERNEL_OK")
</pallas_src>

<mosaic_0001>
module attributes {stable_mosaic.version = 11 : i64} {
  func.func @_object_mlp_kernel(%arg0: i32, %arg1: memref<256x4xf32, #tpu.memory_space<vmem>>, %arg2: memref<32x4xf32, #tpu.memory_space<vmem>>, %arg3: memref<32x1xf32, #tpu.memory_space<vmem>>, %arg4: memref<16x32xf32, #tpu.memory_space<vmem>>, %arg5: memref<16x1xf32, #tpu.memory_space<vmem>>, %arg6: memref<16x256xf32, #tpu.memory_space<vmem>>) attributes {dimension_semantics = [#tpu.dimension_semantics<parallel>], iteration_bounds = array<i64: 2>, scalar_prefetch = 0 : i64, scratch_operands = 0 : i64, tpu.core_type = #tpu.core_type<tc>, window_params = [{transform_indices = @transform_0, window_bounds = array<i64: 256, 4>}, {pipeline_mode = #tpu.pipeline_mode<synchronous>, transform_indices = @transform_1, window_bounds = array<i64: 32, 4>}, {pipeline_mode = #tpu.pipeline_mode<synchronous>, transform_indices = @transform_2, window_bounds = array<i64: 32, 1>}, {pipeline_mode = #tpu.pipeline_mode<synchronous>, transform_indices = @transform_3, window_bounds = array<i64: 16, 32>}, {pipeline_mode = #tpu.pipeline_mode<synchronous>, transform_indices = @transform_4, window_bounds = array<i64: 16, 1>}, {transform_indices = @transform_5, window_bounds = array<i64: 16, 256>}]} {
    %c0 = arith.constant 0 : index
    %c0_0 = arith.constant 0 : index
    %0 = vector.load %arg1[%c0, %c0_0] : memref<256x4xf32, #tpu.memory_space<vmem>>, vector<256x4xf32>
    %c0_1 = arith.constant 0 : index
    %c0_2 = arith.constant 0 : index
    %1 = vector.load %arg2[%c0_1, %c0_2] : memref<32x4xf32, #tpu.memory_space<vmem>>, vector<32x4xf32>
    "tpu.trace_start"() <{level = 10 : i32, message = "hi,ni->hn"}> : () -> ()
    %cst = arith.constant dense<0.000000e+00> : vector<32x256xf32>
    %2 = tpu.matmul %1, %0, %cst {dimension_numbers = #tpu.dot_dimension_numbers<[1], [1], [0], [0], [0, 0, 1, 0], [], []>} : vector<32x4xf32>, vector<256x4xf32>, vector<32x256xf32> -> vector<32x256xf32>
    "tpu.trace_stop"() : () -> ()
    %c0_3 = arith.constant 0 : index
    %c0_4 = arith.constant 0 : index
    %3 = vector.load %arg3[%c0_3, %c0_4] : memref<32x1xf32, #tpu.memory_space<vmem>>, vector<32x1xf32>
    %4 = vector.broadcast %3 : vector<32x1xf32> to vector<32x256xf32>
    %5 = arith.addf %2, %4 : vector<32x256xf32>
    %cst_5 = arith.constant 0.000000e+00 : f32
    %6 = vector.broadcast %cst_5 : f32 to vector<32x256xf32>
    %7 = arith.maximumf %5, %6 : vector<32x256xf32>
    %c0_6 = arith.constant 0 : index
    %c0_7 = arith.constant 0 : index
    %8 = vector.load %arg4[%c0_6, %c0_7] : memref<16x32xf32, #tpu.memory_space<vmem>>, vector<16x32xf32>
    %cst_8 = arith.constant dense<0.000000e+00> : vector<16x256xf32>
    %9 = tpu.matmul %8, %7, %cst_8 {dimension_numbers = #tpu.dot_dimension_numbers<[1], [0], [0], [1], [0, 0, 1, 1], [], []>} : vector<16x32xf32>, vector<32x256xf32>, vector<16x256xf32> -> vector<16x256xf32>
    %c0_9 = arith.constant 0 : index
    %c0_10 = arith.constant 0 : index
    %10 = vector.load %arg5[%c0_9, %c0_10] : memref<16x1xf32, #tpu.memory_space<vmem>>, vector<16x1xf32>
    %11 = vector.broadcast %10 : vector<16x1xf32> to vector<16x256xf32>
    %12 = arith.addf %9, %11 : vector<16x256xf32>
    %c0_11 = arith.constant 0 : index
    %c0_12 = arith.constant 0 : index
    %13 = vector.load %arg6[%c0_11, %c0_12] : memref<16x256xf32, #tpu.memory_space<vmem>>, vector<16x256xf32>
    tpu.vector_store %arg6[%c0_11, %c0_12], %12 {strides = array<i32>} : memref<16x256xf32, #tpu.memory_space<vmem>>, vector<16x256xf32>,
    return
  }
  func.func @transform_0(%arg0: i32) -> (i32, i32) {
    %c0_i32 = arith.constant 0 : i32
    %c0_i32_0 = arith.constant 0 : i32
    return %arg0, %c0_i32 : i32, i32
  }
  func.func @transform_1(%arg0: i32) -> (i32, i32) {
    %c0_i32 = arith.constant 0 : i32
    %c0_i32_0 = arith.constant 0 : i32
    %c0_i32_1 = arith.constant 0 : i32
    return %c0_i32, %c0_i32_0 : i32, i32
  }
  func.func @transform_2(%arg0: i32) -> (i32, i32) {
    %c0_i32 = arith.constant 0 : i32
    %c0_i32_0 = arith.constant 0 : i32
    %c0_i32_1 = arith.constant 0 : i32
    return %c0_i32, %c0_i32_0 : i32, i32
  }
  func.func @transform_3(%arg0: i32) -> (i32, i32) {
    %c0_i32 = arith.constant 0 : i32
    %c0_i32_0 = arith.constant 0 : i32
    %c0_i32_1 = arith.constant 0 : i32
    return %c0_i32, %c0_i32_0 : i32, i32
  }
  func.func @transform_4(%arg0: i32) -> (i32, i32) {
    %c0_i32 = arith.constant 0 : i32
    %c0_i32_0 = arith.constant 0 : i32
    %c0_i32_1 = arith.constant 0 : i32
    return %c0_i32, %c0_i32_0 : i32, i32
  }
  func.func @transform_5(%arg0: i32) -> (i32, i32) {
    %c0_i32 = arith.constant 0 : i32
    %c0_i32_0 = arith.constant 0 : i32
    return %c0_i32, %arg0 : i32, i32
  }
}

</mosaic_0001>

<llo_original>
// kernel: object_model_forward_t.1
$region0: #{object_model_forward_t.1}
  #allocation0 [shape = 'u32[]', space=smem, size = 0x4, offset = 0x4, fixed_abs, tag = 'smem constant byte address 0x4 - core index']
  #allocation1 [shape = 'u32[72,128]{1,0:T(1,128)}', space=vmem, size = 0x9000, scoped, tag = 'internal scratch']
  %s0 = inlined_call_operand.vmem [shape: f32[300,4], index: 0, kind: input, shape index: {}]
  %s1 = inlined_call_operand.vmem [shape: f32[32,4], index: 1, kind: input, shape index: {}]
  %s2 = inlined_call_operand.vmem [shape: f32[32,1], index: 2, kind: input, shape index: {}]
  %s3 = inlined_call_operand.vmem [shape: f32[16,32], index: 3, kind: input, shape index: {}]
  %s4 = inlined_call_operand.vmem [shape: f32[16,1], index: 4, kind: input, shape index: {}]
  %s5 = inlined_call_operand.hbm [shape: f32[16,300], index: 5, kind: output, shape index: {}]
  %s6 = sld [smem:[#allocation0]]
  $region53: #{object_model_forward_t.1} parent=0
    _
  %s8 = ssub.s32 1, %s6
  %s9 = scalar_select 0, %s8, %s6
  $region1: #{object_model_forward_t.1} parent=0
    #allocation2 [shape = 'u8[32768]{0}', space=vmem, size = 0x8000, scoped, tag = 'output window, operand 0']
    #allocation3 [shape = 's32[2]{0}', space=sflag, size = 0x8, scoped, tag = 'scoped memory for object_model_forward_t.1']
    %10 = vsyncpa [#allocation3], 0
    %s11 = scalar_lea.sflag [#allocation3], 1
    %12 = vsyncpa %s11, 0
    loop: start=0, step=1, limit=4
    $region2: #{object_model_forward_t.1} parent=1 // loop_pre_header
      _
    $region3: #{object_model_forward_t.1} parent=1 // loop_header
      %s14 = sphi 0, %s18
      %p15 = scmp.ge.s32.totalorder %s14, 4
      %s24 = sphi 0, %s26
      %s27 = sphi 0, %s24
      %s28 = sphi 0, %s27
      %s44 = sphi 0, %s28
      %s48 = sphi 0, %s48
      %s50 = sphi 0, %s48
      %s51 = sphi 0, %s50
      %s65 = sphi 0, %s51
      %s69 = sphi 0, %s69
      %s71 = sphi 0, %s69
      %s72 = sphi 0, %s71
      %s86 = sphi 0, %s72
      %s90 = sphi 0, %s90
      %s92 = sphi 0, %s90
      %s93 = sphi 0, %s92
      %s107 = sphi 0, %s93
      %s111 = sphi 0, %s111
      %s113 = sphi 0, %s111
      %s114 = sphi 0, %s113
      %s128 = sphi 0, %s114
      %s134 = sphi 0, %s136
      %s137 = sphi 0, %s134
      %s138 = sphi 0, %s137
      %s154 = sphi 0, %s138
    $region4: #{object_model_forward_t.1} parent=1 // loop_header_branch
      %17 = sbr.rel (%p15) target = $region8
    $region5: #{object_model_forward_t.1} parent=1 // loop_body
      %s19 = ssub.s32 %s14, 1
      %s20 = ssub.s32 %s14, 2
      %s21 = sadd.s32 %s14, 1
      %s22 = ssub.s32 %s14, %s21
      %p23 = scmp.eq.s32.totalorder %s22, 0
      %s25 = sadd.s32 %s24, 1
      %s26 = scalar_select %p23, %s24, %s25
      %p29 = pneg %p23
      %p30 = scmp.eq.s32.totalorder %s14, 1
      %p31 = por %p29, %p30
      %p32 = scmp.ne.s32.totalorder %s24, %s27
      %p33 = scmp.eq.s32.totalorder %s14, 0
      %p34 = por %p32, %p33
      %p35 = scmp.ne.s32.totalorder %s24, %s27
      %p36 = scmp.eq.s32.totalorder %s19, 1
      %p37 = por %p35, %p36
      %p38 = scmp.ne.s32.totalorder %s27, %s28
      %p39 = scmp.eq.s32.totalorder %s19, 0
      %p40 = por %p38, %p39
      %p41 = scmp.ne.s32.totalorder %s27, %s28
      %p42 = scmp.eq.s32.totalorder %s20, 1
      %p43 = por %p41, %p42
      %p45 = scmp.ne.s32.totalorder %s28, %s44
      %p46 = scmp.eq.s32.totalorder %s20, 0
      %p47 = por %p45, %p46
      %s49 = sadd.s32 %s48, 1
      %p52 = scmp.eq.s32.totalorder %s14, 1
      %p53 = scmp.ne.s32.totalorder %s48, %s50
      %p54 = scmp.eq.s32.totalorder %s14, 0
      %p55 = por %p53, %p54
      %p56 = scmp.ne.s32.totalorder %s48, %s50
      %p57 = scmp.eq.s32.totalorder %s19, 1
      %p58 = por %p56, %p57
      %p59 = scmp.ne.s32.totalorder %s50, %s51
      %p60 = scmp.eq.s32.totalorder %s19, 0
      %p61 = por %p59, %p60
      %p62 = scmp.ne.s32.totalorder %s50, %s51
      %p63 = scmp.eq.s32.totalorder %s20, 1
      %p64 = por %p62, %p63
      %p66 = scmp.ne.s32.totalorder %s51, %s65
      %p67 = scmp.eq.s32.totalorder %s20, 0
      %p68 = por %p66, %p67
      %s70 = sadd.s32 %s69, 1
      %p73 = scmp.eq.s32.totalorder %s14, 1
      %p74 = scmp.ne.s32.totalorder %s69, %s71
      %p75 = scmp.eq.s32.totalorder %s14, 0
      %p76 = por %p74, %p75
      %p77 = scmp.ne.s32.totalorder %s69, %s71
      %p78 = scmp.eq.s32.totalorder %s19, 1
      %p79 = por %p77, %p78
      %p80 = scmp.ne.s32.totalorder %s71, %s72
      %p81 = scmp.eq.s32.totalorder %s19, 0
      %p82 = por %p80, %p81
      %p83 = scmp.ne.s32.totalorder %s71, %s72
      %p84 = scmp.eq.s32.totalorder %s20, 1
      %p85 = por %p83, %p84
      %p87 = scmp.ne.s32.totalorder %s72, %s86
      %p88 = scmp.eq.s32.totalorder %s20, 0
      %p89 = por %p87, %p88
      %s91 = sadd.s32 %s90, 1
      %p94 = scmp.eq.s32.totalorder %s14, 1
      %p95 = scmp.ne.s32.totalorder %s90, %s92
      %p96 = scmp.eq.s32.totalorder %s14, 0
      %p97 = por %p95, %p96
      %p98 = scmp.ne.s32.totalorder %s90, %s92
      %p99 = scmp.eq.s32.totalorder %s19, 1
      %p100 = por %p98, %p99
      %p101 = scmp.ne.s32.totalorder %s92, %s93
      %p102 = scmp.eq.s32.totalorder %s19, 0
      %p103 = por %p101, %p102
      %p104 = scmp.ne.s32.totalorder %s92, %s93
      %p105 = scmp.eq.s32.totalorder %s20, 1
      %p106 = por %p104, %p105
      %p108 = scmp.ne.s32.totalorder %s93, %s107
      %p109 = scmp.eq.s32.totalorder %s20, 0
      %p110 = por %p108, %p109
      %s112 = sadd.s32 %s111, 1
      %p115 = scmp.eq.s32.totalorder %s14, 1
      %p116 = scmp.ne.s32.totalorder %s111, %s113
      %p117 = scmp.eq.s32.totalorder %s14, 0
      %p118 = por %p116, %p117
      %p119 = scmp.ne.s32.totalorder %s111, %s113
      %p120 = scmp.eq.s32.totalorder %s19, 1
      %p121 = por %p119, %p120
      %p122 = scmp.ne.s32.totalorder %s113, %s114
      %p123 = scmp.eq.s32.totalorder %s19, 0
      %p124 = por %p122, %p123
      %p125 = scmp.ne.s32.totalorder %s113, %s114
      %p126 = scmp.eq.s32.totalorder %s20, 1
      %p127 = por %p125, %p126
      %p129 = scmp.ne.s32.totalorder %s114, %s128
      %p130 = scmp.eq.s32.totalorder %s20, 0
      %p131 = por %p129, %p130
      %s132 = ssub.s32 %s14, %s21
      %p133 = scmp.eq.s32.totalorder %s132, 0
      %s135 = sadd.s32 %s134, 1
      %s136 = scalar_select %p133, %s134, %s135
      %p139 = pneg %p133
      %p140 = scmp.eq.s32.totalorder %s14, 1
      %p141 = por %p139, %p140
      %p142 = scmp.ne.s32.totalorder %s134, %s137
      %p143 = scmp.eq.s32.totalorder %s14, 0
      %p144 = por %p142, %p143
      %p145 = scmp.ne.s32.totalorder %s134, %s137
      %p146 = scmp.eq.s32.totalorder %s19, 1
      %p147 = por %p145, %p146
      %p148 = scmp.ne.s32.totalorder %s137, %s138
      %p149 = scmp.eq.s32.totalorder %s19, 0
      %p150 = por %p148, %p149
      %p151 = scmp.ne.s32.totalorder %s137, %s138
      %p152 = scmp.eq.s32.totalorder %s20, 1
      %p153 = por %p151, %p152
      %p155 = scmp.ne.s32.totalorder %s138, %s154
      %p156 = scmp.eq.s32.totalorder %s20, 0
      %p157 = por %p155, %p156
      %p158 = scmp.le.s32.totalorder 1, %s14
      %p159 = scmp.lt.s32.totalorder %s14, 3
      %p160 = pnand %p158, %p159
      %p161 = pneg %p160
      // Predicated region
      $region9: #{object_model_forward_t.1} parent=5 // pred_check
        _
      $region10: #{object_model_forward_t.1} parent=5 // pred_check_branch
        %163 = sbr.rel (%p160) target = $region12
      $region11: #{object_model_forward_t.1} parent=5 // pred_region
        %s164 = ssub.s32 %s14, 1
        // Predicated region
        $region13: #{object_model_forward_t.1} parent=11 // pred_check
          %p165 = pneg %p61
        $region14: #{object_model_forward_t.1} parent=11 // pred_check_branch
          %167 = sbr.rel (%p165) target = $region16
        $region15: #{object_model_forward_t.1} parent=11 // pred_region
          _
        $region16: #{object_model_forward_t.1} parent=11 // pred_fallthru
          _
        // Predicated region
        $region17: #{object_model_forward_t.1} parent=11 // pred_check
          %p168 = pneg %p82
        $region18: #{object_model_forward_t.1} parent=11 // pred_check_branch
          %170 = sbr.rel (%p168) target = $region20
        $region19: #{object_model_forward_t.1} parent=11 // pred_region
          _
        $region20: #{object_model_forward_t.1} parent=11 // pred_fallthru
          _
        // Predicated region
        $region21: #{object_model_forward_t.1} parent=11 // pred_check
          %p171 = pneg %p103
        $region22: #{object_model_forward_t.1} parent=11 // pred_check_branch
          %173 = sbr.rel (%p171) target = $region24
        $region23: #{object_model_forward_t.1} parent=11 // pred_region
          _
        $region24: #{object_model_forward_t.1} parent=11 // pred_fallthru
          _
        // Predicated region
        $region25: #{object_model_forward_t.1} parent=11 // pred_check
          %p174 = pneg %p124
        $region26: #{object_model_forward_t.1} parent=11 // pred_check_branch
          %176 = sbr.rel (%p174) target = $region28
        $region27: #{object_model_forward_t.1} parent=11 // pred_region
          _
        $region28: #{object_model_forward_t.1} parent=11 // pred_fallthru
          _
      $region12: #{object_model_forward_t.1} parent=5 // pred_fallthru
        _
      %p177 = scmp.lt.s32.totalorder %s14, 2
      // Predicated region
      $region29: #{object_model_forward_t.1} parent=5 // pred_check
        %p178 = pneg %p177
      $region30: #{object_model_forward_t.1} parent=5 // pred_check_branch
        %180 = sbr.rel (%p178) target = $region32
      $region31: #{object_model_forward_t.1} parent=5 // pred_region
        // Predicated region
        $region33: #{object_model_forward_t.1} parent=31 // pred_check
          %p181 = pneg %p34
        $region34: #{object_model_forward_t.1} parent=31 // pred_check_branch
          %183 = sbr.rel (%p181) target = $region36
        $region35: #{object_model_forward_t.1} parent=31 // pred_region
          %s184 = smul.u32 32, %s14
          %s185 = ssub.s32 38, %s184
          %p186 = scmp.lt.s32.totalorder %s185, 32
          %s187 = scalar_select %p186, %s185, 32
          %s188 = smul.u32 8, %s187
          %p189 = scmp.lt.s32.totalorder %s184, 37
          %s190 = scalar_select %p189, %s184, 37
          %s191 = smul.addr %s190, 8
          %s192 = scalar_lea.vmem %s0, %s191
          %s193 = smul.u32 32, %s14
          %s194 = ssub.s32 38, %s193
          %p195 = scmp.lt.s32.totalorder %s194, 32
          %s196 = scalar_select %p195, %s194, 32
          %s197 = smul.u32 8, %s196
        $region36: #{object_model_forward_t.1} parent=31 // pred_fallthru
          _
      $region32: #{object_model_forward_t.1} parent=5 // pred_fallthru
        _
      %p198 = scmp.le.s32.totalorder 1, %s14
      %p199 = scmp.lt.s32.totalorder %s14, 3
      %p200 = pnand %p198, %p199
      %p201 = pneg %p200
      // Predicated region
      $region37: #{object_model_forward_t.1} parent=5 // pred_check
        _
      $region38: #{object_model_forward_t.1} parent=5 // pred_check_branch
        %203 = sbr.rel (%p200) target = $region40
      $region39: #{object_model_forward_t.1} parent=5 // pred_region
        %s204 = ssub.s32 %s14, 1
        %s205 = smul.u32 32, %s19
        %s206 = ssub.s32 38, %s205
        %p207 = scmp.lt.s32.totalorder %s206, 32
        %s208 = scalar_select %p207, %s206, 32
        %s209 = smul.u32 8, %s208
        %p210 = scmp.lt.s32.totalorder %s205, 37
        %s211 = scalar_select %p210, %s205, 37
        %s212 = smul.addr %s211, 8
        %s213 = scalar_lea.vmem %s0, %s212
        %p214 = pneg %p40
        %p215 = pneg %p37
        %p216 = pneg %p61
        %p217 = pneg %p58
        %p218 = pneg %p82
        %p219 = pneg %p79
        %p220 = pneg %p103
        %p221 = pneg %p100
        %p222 = pneg %p124
        %p223 = pneg %p121
        %p224 = pneg %p150
        %p225 = pneg %p147
        %s226 = sand.u32 %s137, 1
        %s227 = scalar_lea.sflag [#allocation3], %s226
        %s228 = sand.u32 %s137, 1
        %s229 = smul.addr %s228, 32
        %s230 = scalar_lea.vmem [#allocation2], %s229
        %s231 = smul.u32 32, %s19
        %s232 = ssub.s32 38, %s231
        %p233 = scmp.lt.s32.totalorder %s232, 32
        %s234 = scalar_select %p233, %s232, 32
        %s235 = smul.u32 8, %s234
        %p236 = scmp.lt.s32.totalorder %s231, 37
        %s237 = scalar_select %p236, %s231, 37
        %s238 = smul.addr %s237, 8
        %s239 = scalar_lea.vmem %s0, %s238
        %s240 = smul.u32 32, %s19
        %s241 = ssub.s32 38, %s240
        %p242 = scmp.lt.s32.totalorder %s241, 32
        %s243 = scalar_select %p242, %s241, 32
        %s244 = smul.u32 8, %s243
        %s245 = smul.u32 2, %s19
        %s246 = ssub.s32 3, %s245
        %p247 = scmp.lt.s32.totalorder %s246, 2
        %s248 = scalar_select %p247, %s246, 2
        %s249 = smul.u32 16, %s248
        %v250 = vld [vmem:[%s239] sm:$0xff]
        %v251 = vld [vmem:[%s239 + $0x8] sm:$0xff]
        %v252 = vld [vmem:[%s239 + $0x10] sm:$0xff]
        %v253 = vld [vmem:[%s239 + $0x18] sm:$0xff]
        %v254 = vld [vmem:[%s239 + $0x20] sm:$0xff]
        %v255 = vld [vmem:[%s239 + $0x28] sm:$0xff]
        %v256 = vld [vmem:[%s239 + $0x30] sm:$0xff]
        %v257 = vld [vmem:[%s239 + $0x38] sm:$0xff]
        %v258 = vld [vmem:[%s239 + $0x40] sm:$0xff]
        %v259 = vld [vmem:[%s239 + $0x48] sm:$0xff]
        %v260 = vld [vmem:[%s239 + $0x50] sm:$0xff]
        %v261 = vld [vmem:[%s239 + $0x58] sm:$0xff]
        %v262 = vld [vmem:[%s239 + $0x60] sm:$0xff]
        %v263 = vld [vmem:[%s239 + $0x68] sm:$0xff]
        %v264 = vld [vmem:[%s239 + $0x70] sm:$0xff]
        %v265 = vld [vmem:[%s239 + $0x78] sm:$0xff]
        %v266 = vld [vmem:[%s239 + $0x80] sm:$0xff]
        %v267 = vld [vmem:[%s239 + $0x88] sm:$0xff]
        %v268 = vld [vmem:[%s239 + $0x90] sm:$0xff]
        %v269 = vld [vmem:[%s239 + $0x98] sm:$0xff]
        %v270 = vld [vmem:[%s239 + $0xa0] sm:$0xff]
        %v271 = vld [vmem:[%s239 + $0xa8] sm:$0xff]
        %v272 = vld [vmem:[%s239 + $0xb0] sm:$0xff]
        %v273 = vld [vmem:[%s239 + $0xb8] sm:$0xff]
        %v274 = vld [vmem:[%s239 + $0xc0] sm:$0xff]
        %v275 = vld [vmem:[%s239 + $0xc8] sm:$0xff]
        %v276 = vld [vmem:[%s239 + $0xd0] sm:$0xff]
        %v277 = vld [vmem:[%s239 + $0xd8] sm:$0xff]
        %v278 = vld [vmem:[%s239 + $0xe0] sm:$0xff]
        %v279 = vld [vmem:[%s239 + $0xe8] sm:$0xff]
        %v280 = vld [vmem:[%s239 + $0xf0] sm:$0xff]
        %v281 = vld [vmem:[%s239 + $0xf8] sm:$0xff]
        %v282 = vld [vmem:[%s1] sm:$0xff]
        %v283 = vld [vmem:[%s1 + $0x8] sm:$0xff]
        %v284 = vld [vmem:[%s1 + $0x10] sm:$0xff]
        %v285 = vld [vmem:[%s1 + $0x18] sm:$0xff]
        %v286 = vld [vmem:[%s2] sm:$0xff]
        %v287 = vld [vmem:[%s2 + $0x8] sm:$0xff]
        %v288 = vld [vmem:[%s2 + $0x10] sm:$0xff]
        %v289 = vld [vmem:[%s2 + $0x18] sm:$0xff]
        %291 = vset.pattern.permute.xlu0 0
        %292 = vperm.xlu0 %291, %v286
        %v293 = vpop.permute.xlu0 %292
        %296 = vset.pattern.permute.xlu0 0
        %297 = vperm.xlu0 %296, %v287
        %v298 = vpop.permute.xlu0 %297
        %301 = vset.pattern.permute.xlu0 0
        %302 = vperm.xlu0 %301, %v288
        %v303 = vpop.permute.xlu0 %302
        %306 = vset.pattern.permute.xlu0 0
        %307 = vperm.xlu0 %306, %v289
        %v308 = vpop.permute.xlu0 %307
        %vm310 = vcmask 31744
        %v312 = vsel %vm310, %v282, 0
        %v315 = vsel %vm310, %v283, 0
        %v318 = vsel %vm310, %v284, 0
        %v321 = vsel %vm310, %v285, 0
        %v324 = vsel %vm310, %v250, 0
        %v327 = vsel %vm310, %v251, 0
        %v330 = vsel %vm310, %v252, 0
        %v333 = vsel %vm310, %v253, 0
        %v336 = vsel %vm310, %v254, 0
        %v339 = vsel %vm310, %v255, 0
        %v342 = vsel %vm310, %v256, 0
        %v345 = vsel %vm310, %v257, 0
        %v348 = vsel %vm310, %v258, 0
        %v351 = vsel %vm310, %v259, 0
        %v354 = vsel %vm310, %v260, 0
        %v357 = vsel %vm310, %v261, 0
        %v360 = vsel %vm310, %v262, 0
        %v363 = vsel %vm310, %v263, 0
        %v366 = vsel %vm310, %v264, 0
        %v369 = vsel %vm310, %v265, 0
        %v372 = vsel %vm310, %v266, 0
        %v375 = vsel %vm310, %v267, 0
        %v378 = vsel %vm310, %v268, 0
        %v381 = vsel %vm310, %v269, 0
        %v384 = vsel %vm310, %v270, 0
        %v387 = vsel %vm310, %v271, 0
        %v390 = vsel %vm310, %v272, 0
        %v393 = vsel %vm310, %v273, 0
        %v396 = vsel %vm310, %v274, 0
        %v399 = vsel %vm310, %v275, 0
        %v402 = vsel %vm310, %v276, 0
        %v405 = vsel %vm310, %v277, 0
        %v408 = vsel %vm310, %v278, 0
        %v411 = vsel %vm310, %v279, 0
        %v414 = vsel %vm310, %v280, 0
        %v417 = vsel %vm310, %v281, 0
        %419 = vmatpush.xpose.msra.mxu0 %v369
        %420 = vmatpush.xpose.msra.mxu0 %v366
        %421 = vmatpush.xpose.msra.mxu0 %v363
        %422 = vmatpush.xpose.msra.mxu0 %v360
        %423 = vmatpush.xpose.msra.mxu0 %v357
        %424 = vmatpush.xpose.msra.mxu0 %v354
        %425 = vmatpush.xpose.msra.mxu0 %v351
        %426 = vmatpush.xpose.msra.mxu0 %v348
        %427 = vmatpush.xpose.msra.mxu0 %v345
        %428 = vmatpush.xpose.msra.mxu0 %v342
        %429 = vmatpush.xpose.msra.mxu0 %v339
        %430 = vmatpush.xpose.msra.mxu0 %v336
        %431 = vmatpush.xpose.msra.mxu0 %v333
        %432 = vmatpush.xpose.msra.mxu0 %v330
        %433 = vmatpush.xpose.msra.mxu0 %v327
        %434 = vmatpush.xpose.msra.mxu0 %v324
        %435 = vmatmul.f32.gmra.mxu0 %v312
        %v436 = vpop.f32.mrf.mxu0
        %v437 = vadd.f32 %v293, %v436
        %438 = vmatmul.f32.gmra.mxu0 %v315
        %v439 = vpop.f32.mrf.mxu0
        %v440 = vadd.f32 %v298, %v439
        %441 = vmatmul.f32.gmra.mxu0 %v318
        %v442 = vpop.f32.mrf.mxu0
        %v443 = vadd.f32 %v303, %v442
        %444 = vmatmul.f32.gmra.mxu0 %v321
        %v445 = vpop.f32.mrf.mxu0
        %v446 = vadd.f32 %v308, %v445
        %447 = vdwg.mxu0
        %448 = vmatpush.xpose.msra.mxu0 %v417
        %449 = vmatpush.xpose.msra.mxu0 %v414
        %450 = vmatpush.xpose.msra.mxu0 %v411
        %451 = vmatpush.xpose.msra.mxu0 %v408
        %452 = vmatpush.xpose.msra.mxu0 %v405
        %453 = vmatpush.xpose.msra.mxu0 %v402
        %454 = vmatpush.xpose.msra.mxu0 %v399
        %455 = vmatpush.xpose.msra.mxu0 %v396
        %456 = vmatpush.xpose.msra.mxu0 %v393
        %457 = vmatpush.xpose.msra.mxu0 %v390
        %458 = vmatpush.xpose.msra.mxu0 %v387
        %459 = vmatpush.xpose.msra.mxu0 %v384
        %460 = vmatpush.xpose.msra.mxu0 %v381
        %461 = vmatpush.xpose.msra.mxu0 %v378
        %462 = vmatpush.xpose.msra.mxu0 %v375
        %463 = vmatpush.xpose.msra.mxu0 %v372
        %464 = vmatmul.f32.gmra.mxu0 %v312
        %v465 = vpop.f32.mrf.mxu0
        %v466 = vadd.f32 %v293, %v465
        %467 = vmatmul.f32.gmra.mxu0 %v315
        %v468 = vpop.f32.mrf.mxu0
        %v469 = vadd.f32 %v298, %v468
        %470 = vmatmul.f32.gmra.mxu0 %v318
        %v471 = vpop.f32.mrf.mxu0
        %v472 = vadd.f32 %v303, %v471
        %473 = vmatmul.f32.gmra.mxu0 %v321
        %v474 = vpop.f32.mrf.mxu0
        %v475 = vadd.f32 %v308, %v474
        %476 = vdwg.mxu0
        %v477 = vmax.f32 %v437, 0.0
        %v478 = vmax.f32 %v466, 0.0
        %v479 = vmax.f32 %v440, 0.0
        %v480 = vmax.f32 %v469, 0.0
        %v481 = vmax.f32 %v443, 0.0
        %v482 = vmax.f32 %v472, 0.0
        %v483 = vmax.f32 %v446, 0.0
        %v484 = vmax.f32 %v475, 0.0
        %v485 = vld [vmem:[%s3] sm:$0xff]
        %v486 = vld [vmem:[%s3 + $0x8] sm:$0xff]
        %v487 = vld [vmem:[%s4] sm:$0xff]
        %v488 = vld [vmem:[%s4 + $0x8] sm:$0xff]
        %490 = vset.pattern.permute.xlu0 0
        %491 = vperm.xlu0 %490, %v487
        %v492 = vpop.permute.xlu0 %491
        %495 = vset.pattern.permute.xlu0 0
        %496 = vperm.xlu0 %495, %v488
        %v497 = vpop.permute.xlu0 %496
        %vm499 = vcmask 261120
        %v501 = vsel %vm499, %v485, 0
        %v504 = vsel %vm499, %v486, 0
        %506 = vmatpush.msra.mxu0 0.0
        %507 = vmatpush.msra.mxu0 0.0
        %508 = vmatpush.msra.mxu0 0.0
        %509 = vmatpush.msra.mxu0 0.0
        %510 = vmatpush.msra.mxu0 0.0
        %511 = vmatpush.msra.mxu0 0.0
        %512 = vmatpush.msra.mxu0 0.0
        %513 = vmatpush.msra.mxu0 0.0
        %514 = vmatpush.msra.mxu0 0.0
        %515 = vmatpush.msra.mxu0 0.0
        %516 = vmatpush.msra.mxu0 0.0
        %517 = vmatpush.msra.mxu0 0.0
        %518 = vmatpush.msra.mxu0 %v483
        %519 = vmatpush.msra.mxu0 %v481
        %520 = vmatpush.msra.mxu0 %v479
        %521 = vmatpush.msra.mxu0 %v477
        %522 = vmatmul.f32.gmra.mxu0 %v501
        %v523 = vpop.f32.mrf.mxu0
        %v524 = vadd.f32 %v492, %v523
        %525 = vmatmul.f32.gmra.mxu0 %v504
        %v526 = vpop.f32.mrf.mxu0
        %v527 = vadd.f32 %v497, %v526
        %528 = vdwg.mxu0
        %529 = vmatpush.msra.mxu0 0.0
        %530 = vmatpush.msra.mxu0 0.0
        %531 = vmatpush.msra.mxu0 0.0
        %532 = vmatpush.msra.mxu0 0.0
        %533 = vmatpush.msra.mxu0 0.0
        %534 = vmatpush.msra.mxu0 0.0
        %535 = vmatpush.msra.mxu0 0.0
        %536 = vmatpush.msra.mxu0 0.0
        %537 = vmatpush.msra.mxu0 0.0
        %538 = vmatpush.msra.mxu0 0.0
        %539 = vmatpush.msra.mxu0 0.0
        %540 = vmatpush.msra.mxu0 0.0
        %541 = vmatpush.msra.mxu0 %v484
        %542 = vmatpush.msra.mxu0 %v482
        %543 = vmatpush.msra.mxu0 %v480
        %544 = vmatpush.msra.mxu0 %v478
        %545 = vmatmul.f32.gmra.mxu0 %v501
        %v546 = vpop.f32.mrf.mxu0
        %v547 = vadd.f32 %v492, %v546
        %548 = vmatmul.f32.gmra.mxu0 %v504
        %v549 = vpop.f32.mrf.mxu0
        %v550 = vadd.f32 %v497, %v549
        %551 = vdwg.mxu0
        %552 = vst [vmem:[%s230] sm:$0xff] %v524
        %553 = vst [vmem:[%s230 + $0x8] sm:$0xff] %v547
        %554 = vst [vmem:[%s230 + $0x10] sm:$0xff] %v527
        %555 = vst [vmem:[%s230 + $0x18] sm:$0xff] %v550
        %s556 = sand.u32 %s137, 1
        %s557 = scalar_lea.sflag [#allocation3], %s556
        %s558 = sand.u32 %s137, 1
        %s559 = smul.addr %s558, 32
        %s560 = scalar_lea.vmem [#allocation2], %s559
        // Predicated region
        $region41: #{object_model_forward_t.1} parent=39 // pred_check
          %p561 = pneg %p147
        $region42: #{object_model_forward_t.1} parent=39 // pred_check_branch
          %563 = sbr.rel (%p561) target = $region44
        $region43: #{object_model_forward_t.1} parent=39 // pred_region
          %s564 = smul.u32 2, %s19
          %s565 = ssub.s32 3, %s564
          %p566 = scmp.lt.s32.totalorder %s565, 2
          %s567 = scalar_select %p566, %s565, 2
          %s568 = smul.u32 16, %s567
          %s569 = ssub.s32 32, %s568
          %s570 = sshll.u32 %s569, 4
          %571 = vsyncadd %s557, %s570
          %p572 = scmp.ne.s32.totalorder 0, %s568
          %s573 = smul.addr %s564, 8
          %s574 = scalar_lea.hbm %s5, %s573
          %s575 = smul.u32 %s567, 8
          %s576 = smul.u32 %s575, 2
          %s577 = sshll.u32 %s560, 4
          %s578 = int_to_ptr.vmem [resolvable:$true] %s577
          %s579 = sshll.u32 %s574, 4
          %s580 = int_to_ptr.hbm [resolvable:$true] %s579
          %s581 = sshll.u32 %s576, 4
          %585 = dma.vmem_to_hbm [thread:$0]  (%p572), %s578, %s581, %s580, %s557, 256, 384, %s575
        $region44: #{object_model_forward_t.1} parent=39 // pred_fallthru
          _
      $region40: #{object_model_forward_t.1} parent=5 // pred_fallthru
        _
      %p586 = scmp.le.s32.totalorder 2, %s14
      // Predicated region
      $region45: #{object_model_forward_t.1} parent=5 // pred_check
        %p587 = pneg %p586
      $region46: #{object_model_forward_t.1} parent=5 // pred_check_branch
        %589 = sbr.rel (%p587) target = $region48
      $region47: #{object_model_forward_t.1} parent=5 // pred_region
        %s590 = ssub.s32 %s14, 2
        // Predicated region
        $region49: #{object_model_forward_t.1} parent=47 // pred_check
          %p591 = pneg %p153
        $region50: #{object_model_forward_t.1} parent=47 // pred_check_branch
          %593 = sbr.rel (%p591) target = $region52
        $region51: #{object_model_forward_t.1} parent=47 // pred_region
          %s594 = sand.u32 %s138, 1
          %s595 = scalar_lea.sflag [#allocation3], %s594
          %s596 = sand.u32 %s138, 1
          %s597 = smul.addr %s596, 32
          %s598 = scalar_lea.vmem [#allocation2], %s597
          %600 = dma.done %s595, 512
        $region52: #{object_model_forward_t.1} parent=47 // pred_fallthru
          _
      $region48: #{object_model_forward_t.1} parent=5 // pred_fallthru
        _
    $region6: #{object_model_forward_t.1} parent=1 // loop_footer
      %s18 = sadd.s32 1, %s14
    $region7: #{object_model_forward_t.1} parent=1 // loop_footer_branch
      %13 = sbr.rel target = $region3
    $region8: #{object_model_forward_t.1} parent=1 // loop_exit
      _
    %601 = vsyncpa [#allocation3], 1
    %s602 = scalar_lea.sflag [#allocation3], 1
    %603 = vsyncpa %s602, 1

</llo_original>
